<compile_context>
chip_gen: v6e
topology: v6e:2x2x1
jax: 0.10.0
libtpu: 0.0.40
codegen_flags: <defaults>
</compile_context>

<pallas_src>
import functools

import jax
import jax.numpy as jnp
from jax.experimental import pallas as pl
from jax.experimental.pallas import tpu as pltpu


def _channel_attn_kernel(x_ref, w1_ref, b1_ref, w2_ref, b2_ref, o_ref,
                         sum_ref, max_ref, *, hw_total, hw_chunk):
    # x_ref:  (TB, C, HW_CHUNK) block of the flattened input
    # w1_ref: (C, MID), b1_ref: (1, MID), w2_ref: (MID, C), b2_ref: (1, C)
    # o_ref:  (TB, 1, C) output block (written once, on the last HW chunk)
    # sum_ref/max_ref: (TB, C) float32 VMEM accumulators
    s = pl.program_id(1)
    n_s = pl.num_programs(1)

    @pl.when(s == 0)
    def _init():
        sum_ref[...] = jnp.zeros(sum_ref.shape, sum_ref.dtype)
        max_ref[...] = jnp.full(max_ref.shape, -jnp.inf, max_ref.dtype)

    x = x_ref[...]                       # (TB, C, HW_CHUNK), input dtype
    xf = x.astype(jnp.float32)

    # Fused single pass over the chunk: one load, both reductions.
    needs_mask = (hw_total % hw_chunk) != 0   # static (Python) decision
    if needs_mask:
        lane = jax.lax.broadcasted_iota(jnp.int32, x.shape, 2)
        valid = (s * hw_chunk + lane) < hw_total
        x_for_sum = jnp.where(valid, xf, 0.0)
        x_for_max = jnp.where(valid, xf, -jnp.inf)
    else:
        x_for_sum = xf
        x_for_max = xf

    sum_ref[...] = sum_ref[...] + jnp.sum(x_for_sum, axis=-1)              # (TB, C)
    max_ref[...] = jnp.maximum(max_ref[...], jnp.max(x_for_max, axis=-1))  # (TB, C)

    @pl.when(s == n_s - 1)
    def _finalize():
        avg = sum_ref[...] * jnp.float32(1.0 / hw_total)   # (TB, C)
        mx = max_ref[...]                                  # (TB, C)

        w1 = w1_ref[...]
        b1 = b1_ref[...]
        w2 = w2_ref[...]
        b2 = b2_ref[...]

        def shared_mlp(v):  # v: (TB, C) float32
            h = jnp.dot(v, w1, preferred_element_type=jnp.float32) + b1
            h = jnp.maximum(h, 0.0)
            return jnp.dot(h, w2, preferred_element_type=jnp.float32) + b2

        out = jax.nn.sigmoid(shared_mlp(avg) + shared_mlp(mx))   # (TB, C)
        o_ref[...] = out[:, None, :].astype(o_ref.dtype)         # (TB, 1, C)


def channel_attention(x, w1, b1, w2, b2, *, hw_chunk=None, batch_tile=None,
                      target_block_bytes=2 * 1024 * 1024,
                      vmem_limit_bytes=32 * 1024 * 1024):
    """x: (B, C, H, W) NCHW. Returns (B, C, 1, 1) channel-attention map."""
    B, C, H, W = x.shape
    HW = H * W
    MID = w1.shape[1]
    itemsize = jnp.dtype(x.dtype).itemsize

    # --- choose lane (spatial) chunk: multiple of 128, <= padded HW, ~target ---
    hw_padded_min = pl.cdiv(HW, 128) * 128
    if hw_chunk is None:
        target_lanes = target_block_bytes // max(1, C * itemsize)
        hw_chunk = min(target_lanes, hw_padded_min)
    hw_chunk = min(hw_chunk, hw_padded_min)
    hw_chunk = max(128, (hw_chunk // 128) * 128)

    n_chunks = pl.cdiv(HW, hw_chunk)
    hw_padded = n_chunks * hw_chunk

    # --- choose batch tile: largest divisor of B keeping block <= target ------
    if batch_tile is None:
        per_batch_bytes = C * hw_chunk * itemsize
        batch_tile = 1
        for tb in range(1, B + 1):
            if B % tb == 0 and tb * per_batch_bytes <= target_block_bytes:
                batch_tile = tb
    assert B % batch_tile == 0, (B, batch_tile)
    n_btiles = B // batch_tile

    x_flat = x.reshape(B, C, HW)
    if hw_padded != HW:
        x_flat = jnp.pad(x_flat, ((0, 0), (0, 0), (0, hw_padded - HW)))

    kernel = functools.partial(_channel_attn_kernel, hw_total=HW,
                               hw_chunk=hw_chunk)

    out = pl.pallas_call(
        kernel,
        out_shape=jax.ShapeDtypeStruct((B, 1, C), x.dtype),
        grid_spec=pltpu.PrefetchScalarGridSpec(
            num_scalar_prefetch=0,
            grid=(n_btiles, n_chunks),
            in_specs=[
                pl.BlockSpec((batch_tile, C, hw_chunk),
                             lambda b, s: (b, 0, s)),                # x
                pl.BlockSpec((C, MID), lambda b, s: (0, 0)),         # w1 (resident)
                pl.BlockSpec((1, MID), lambda b, s: (0, 0)),         # b1
                pl.BlockSpec((MID, C), lambda b, s: (0, 0)),         # w2
                pl.BlockSpec((1, C), lambda b, s: (0, 0)),           # b2
            ],
            out_specs=pl.BlockSpec((batch_tile, 1, C), lambda b, s: (b, 0, 0)),
            scratch_shapes=[
                pltpu.VMEM((batch_tile, C), jnp.float32),   # running sum
                pltpu.VMEM((batch_tile, C), jnp.float32),   # running max
            ],
        ),
        compiler_params=pltpu.CompilerParams(
            dimension_semantics=("parallel", "arbitrary"),
            vmem_limit_bytes=vmem_limit_bytes,
        ),
    )(x_flat, w1, b1, w2, b2)

    return out.reshape(B, C, 1, 1)


def _reference(x, w1, b1, w2, b2):
    # Pure-JAX reference of the PyTorch forward.
    B, C, H, W = x.shape
    xf = x.reshape(B, C, H * W).astype(jnp.float32)
    avg = xf.mean(axis=-1)
    mx = xf.max(axis=-1)

    def mlp(v):
        h = jnp.maximum(v @ w1 + b1, 0.0)
        return h @ w2 + b2

    return jax.nn.sigmoid(mlp(avg) + mlp(mx)).reshape(B, C, 1, 1)


if __name__ == "__main__":
    # Shapes consistent with the module: channel=32, reduction=16 -> mid=2.
    B, C, H, W = 2, 32, 16, 16
    reduction = 16
    MID = C // reduction

    key = jax.random.PRNGKey(0)
    kx, kw1, kb1, kw2, kb2 = jax.random.split(key, 5)

    x = jax.random.normal(kx, (B, C, H, W), dtype=jnp.float32)

    # PyTorch Linear stores weight as (out, in); kept pre-transposed to
    # (in, out) here for row-major matmuls.
    w1 = jax.random.normal(kw1, (C, MID), dtype=jnp.float32) * 0.1   # Linear(C -> MID)
    b1 = jax.random.normal(kb1, (1, MID), dtype=jnp.float32) * 0.1
    w2 = jax.random.normal(kw2, (MID, C), dtype=jnp.float32) * 0.1   # Linear(MID -> C)
    b2 = jax.random.normal(kb2, (1, C), dtype=jnp.float32) * 0.1

    # 1) Main test: H*W multiple of 128, auto tiling -> single block holding
    #    both batch rows (batch_tile=2, one grid step).
    out = channel_attention(x, w1, b1, w2, b2)
    out = jax.block_until_ready(out)
    ref = _reference(x, w1, b1, w2, b2)
    assert out.shape == (B, C, 1, 1), out.shape
    assert jnp.allclose(out, ref, atol=1e-5, rtol=1e-5), "mismatch vs reference"

    # 2) Multi-chunk + padded-last-chunk + per-batch tiles: H*W = 576,
    #    hw_chunk = 128 -> 5 chunks, last chunk half padding; batch_tile=1
    #    exercises the mask, the accumulation and the batch-tile grid axis.
    x2 = jax.random.normal(jax.random.PRNGKey(1), (B, C, 24, 24), dtype=jnp.float32)
    out2 = channel_attention(x2, w1, b1, w2, b2, hw_chunk=128, batch_tile=1)
    out2 = jax.block_until_ready(out2)
    ref2 = _reference(x2, w1, b1, w2, b2)
    assert out2.shape == (B, C, 1, 1), out2.shape
    assert jnp.allclose(out2, ref2, atol=1e-5, rtol=1e-5), "mismatch vs reference (tiled)"

    # 3) Auto tiling on the non-128-multiple input: single masked 640-lane
    #    chunk with batch_tile=2 (masked path + multi-batch block together).
    out3 = channel_attention(x2, w1, b1, w2, b2)
    out3 = jax.block_until_ready(out3)
    assert jnp.allclose(out3, ref2, atol=1e-5, rtol=1e-5), "mismatch vs reference (auto)"

    print("KERNEL_OK")
</pallas_src>

<mosaic_0001>
module attributes {stable_mosaic.version = 11 : i64} {
  func.func @_channel_attn_kernel(%arg0: i32, %arg1: i32, %arg2: memref<2x32x256xf32, #tpu.memory_space<vmem>>, %arg3: memref<32x2xf32, #tpu.memory_space<vmem>>, %arg4: memref<1x2xf32, #tpu.memory_space<vmem>>, %arg5: memref<2x32xf32, #tpu.memory_space<vmem>>, %arg6: memref<1x32xf32, #tpu.memory_space<vmem>>, %arg7: memref<2x1x32xf32, #tpu.memory_space<vmem>>, %arg8: memref<2x32xf32, #tpu.memory_space<vmem>>, %arg9: memref<2x32xf32, #tpu.memory_space<vmem>>) attributes {dimension_semantics = [#tpu.dimension_semantics<parallel>, #tpu.dimension_semantics<arbitrary>], iteration_bounds = array<i64: 1, 1>, scalar_prefetch = 0 : i64, scratch_operands = 2 : i64, tpu.core_type = #tpu.core_type<tc>, window_params = [{transform_indices = @transform_0, window_bounds = array<i64: 2, 32, 256>}, {pipeline_mode = #tpu.pipeline_mode<synchronous>, transform_indices = @transform_1, window_bounds = array<i64: 32, 2>}, {pipeline_mode = #tpu.pipeline_mode<synchronous>, transform_indices = @transform_2, window_bounds = array<i64: 1, 2>}, {pipeline_mode = #tpu.pipeline_mode<synchronous>, transform_indices = @transform_3, window_bounds = array<i64: 2, 32>}, {pipeline_mode = #tpu.pipeline_mode<synchronous>, transform_indices = @transform_4, window_bounds = array<i64: 1, 32>}, {transform_indices = @transform_5, window_bounds = array<i64: 2, 1, 32>}]} {
    %c0_i32 = arith.constant 0 : i32
    %0 = arith.cmpi eq, %arg1, %c0_i32 : i32
    %1 = arith.extui %0 : i1 to i32
    %c0_i32_0 = arith.constant 0 : i32
    %2 = arith.cmpi ne, %1, %c0_i32_0 : i32
    scf.if %2 {
      %cst_14 = arith.constant 0.000000e+00 : f32
      %15 = vector.broadcast %cst_14 : f32 to vector<2x32xf32>
      %c0_15 = arith.constant 0 : index
      %c0_16 = arith.constant 0 : index
      %16 = vector.load %arg8[%c0_15, %c0_16] : memref<2x32xf32, #tpu.memory_space<vmem>>, vector<2x32xf32>
      tpu.vector_store %arg8[%c0_15, %c0_16], %15 {strides = array<i32>} : memref<2x32xf32, #tpu.memory_space<vmem>>, vector<2x32xf32>,
      %cst_17 = arith.constant 0xFF800000 : f32
      %17 = vector.broadcast %cst_17 : f32 to vector<2x32xf32>
      %c0_18 = arith.constant 0 : index
      %c0_19 = arith.constant 0 : index
      %18 = vector.load %arg9[%c0_18, %c0_19] : memref<2x32xf32, #tpu.memory_space<vmem>>, vector<2x32xf32>
      tpu.vector_store %arg9[%c0_18, %c0_19], %17 {strides = array<i32>} : memref<2x32xf32, #tpu.memory_space<vmem>>, vector<2x32xf32>,
    } else {
    }
    %c0 = arith.constant 0 : index
    %c0_1 = arith.constant 0 : index
    %c0_2 = arith.constant 0 : index
    %3 = vector.load %arg2[%c0, %c0_1, %c0_2] : memref<2x32x256xf32, #tpu.memory_space<vmem>>, vector<2x32x256xf32>
    %c0_3 = arith.constant 0 : index
    %c0_4 = arith.constant 0 : index
    %4 = vector.load %arg8[%c0_3, %c0_4] : memref<2x32xf32, #tpu.memory_space<vmem>>, vector<2x32xf32>
    %cst = arith.constant dense<0.000000e+00> : vector<2x32xf32>
    %5 = vector.multi_reduction <add>, %3, %cst [2] : vector<2x32x256xf32> to vector<2x32xf32>
    %6 = arith.addf %4, %5 : vector<2x32xf32>
    %c0_5 = arith.constant 0 : index
    %c0_6 = arith.constant 0 : index
    %7 = vector.load %arg8[%c0_5, %c0_6] : memref<2x32xf32, #tpu.memory_space<vmem>>, vector<2x32xf32>
    tpu.vector_store %arg8[%c0_5, %c0_6], %6 {strides = array<i32>} : memref<2x32xf32, #tpu.memory_space<vmem>>, vector<2x32xf32>,
    %c0_7 = arith.constant 0 : index
    %c0_8 = arith.constant 0 : index
    %8 = vector.load %arg9[%c0_7, %c0_8] : memref<2x32xf32, #tpu.memory_space<vmem>>, vector<2x32xf32>
    %cst_9 = arith.constant dense<0xFF800000> : vector<2x32xf32>
    %9 = vector.multi_reduction <maximumf>, %3, %cst_9 [2] : vector<2x32x256xf32> to vector<2x32xf32>
    %10 = arith.maximumf %8, %9 : vector<2x32xf32>
    %c0_10 = arith.constant 0 : index
    %c0_11 = arith.constant 0 : index
    %11 = vector.load %arg9[%c0_10, %c0_11] : memref<2x32xf32, #tpu.memory_space<vmem>>, vector<2x32xf32>
    tpu.vector_store %arg9[%c0_10, %c0_11], %10 {strides = array<i32>} : memref<2x32xf32, #tpu.memory_space<vmem>>, vector<2x32xf32>,
    %c0_i32_12 = arith.constant 0 : i32
    %12 = arith.cmpi eq, %arg1, %c0_i32_12 : i32
    %13 = arith.extui %12 : i1 to i32
    %c0_i32_13 = arith.constant 0 : i32
    %14 = arith.cmpi ne, %13, %c0_i32_13 : i32
    scf.if %14 {
      %c0_14 = arith.constant 0 : index
      %c0_15 = arith.constant 0 : index
      %15 = vector.load %arg8[%c0_14, %c0_15] : memref<2x32xf32, #tpu.memory_space<vmem>>, vector<2x32xf32>
      %cst_16 = arith.constant 3.906250e-03 : f32
      %16 = vector.broadcast %cst_16 : f32 to vector<2x32xf32>
      %17 = arith.mulf %15, %16 : vector<2x32xf32>
      %c0_17 = arith.constant 0 : index
      %c0_18 = arith.constant 0 : index
      %18 = vector.load %arg9[%c0_17, %c0_18] : memref<2x32xf32, #tpu.memory_space<vmem>>, vector<2x32xf32>
      %c0_19 = arith.constant 0 : index
      %c0_20 = arith.constant 0 : index
      %19 = vector.load %arg3[%c0_19, %c0_20] : memref<32x2xf32, #tpu.memory_space<vmem>>, vector<32x2xf32>
      %c0_21 = arith.constant 0 : index
      %c0_22 = arith.constant 0 : index
      %20 = vector.load %arg4[%c0_21, %c0_22] : memref<1x2xf32, #tpu.memory_space<vmem>>, vector<1x2xf32>
      %c0_23 = arith.constant 0 : index
      %c0_24 = arith.constant 0 : index
      %21 = vector.load %arg5[%c0_23, %c0_24] : memref<2x32xf32, #tpu.memory_space<vmem>>, vector<2x32xf32>
      %c0_25 = arith.constant 0 : index
      %c0_26 = arith.constant 0 : index
      %22 = vector.load %arg6[%c0_25, %c0_26] : memref<1x32xf32, #tpu.memory_space<vmem>>, vector<1x32xf32>
      %cst_27 = arith.constant dense<0.000000e+00> : vector<2x2xf32>
      %23 = tpu.matmul %17, %19, %cst_27 {dimension_numbers = #tpu.dot_dimension_numbers<[1], [0], [0], [1], [0, 0, 1, 1], [], []>} : vector<2x32xf32>, vector<32x2xf32>, vector<2x2xf32> -> vector<2x2xf32>
      %24 = vector.broadcast %20 : vector<1x2xf32> to vector<2x2xf32>
      %25 = arith.addf %23, %24 : vector<2x2xf32>
      %cst_28 = arith.constant 0.000000e+00 : f32
      %26 = vector.broadcast %cst_28 : f32 to vector<2x2xf32>
      %27 = arith.maximumf %25, %26 : vector<2x2xf32>
      %cst_29 = arith.constant dense<0.000000e+00> : vector<2x32xf32>
      %28 = tpu.matmul %27, %21, %cst_29 {dimension_numbers = #tpu.dot_dimension_numbers<[1], [0], [0], [1], [0, 0, 1, 1], [], []>} : vector<2x2xf32>, vector<2x32xf32>, vector<2x32xf32> -> vector<2x32xf32>
      %29 = vector.broadcast %22 : vector<1x32xf32> to vector<2x32xf32>
      %30 = arith.addf %28, %29 : vector<2x32xf32>
      %cst_30 = arith.constant dense<0.000000e+00> : vector<2x2xf32>
      %31 = tpu.matmul %18, %19, %cst_30 {dimension_numbers = #tpu.dot_dimension_numbers<[1], [0], [0], [1], [0, 0, 1, 1], [], []>} : vector<2x32xf32>, vector<32x2xf32>, vector<2x2xf32> -> vector<2x2xf32>
      %32 = vector.broadcast %20 : vector<1x2xf32> to vector<2x2xf32>
      %33 = arith.addf %31, %32 : vector<2x2xf32>
      %cst_31 = arith.constant 0.000000e+00 : f32
      %34 = vector.broadcast %cst_31 : f32 to vector<2x2xf32>
      %35 = arith.maximumf %33, %34 : vector<2x2xf32>
      %cst_32 = arith.constant dense<0.000000e+00> : vector<2x32xf32>
      %36 = tpu.matmul %35, %21, %cst_32 {dimension_numbers = #tpu.dot_dimension_numbers<[1], [0], [0], [1], [0, 0, 1, 1], [], []>} : vector<2x2xf32>, vector<2x32xf32>, vector<2x32xf32> -> vector<2x32xf32>
      %37 = vector.broadcast %22 : vector<1x32xf32> to vector<2x32xf32>
      %38 = arith.addf %36, %37 : vector<2x32xf32>
      %39 = arith.addf %30, %38 : vector<2x32xf32>
      %40 = arith.negf %39 : vector<2x32xf32>
      %41 = math.exp %40 : vector<2x32xf32>
      %cst_33 = arith.constant 1.000000e+00 : f32
      %42 = vector.broadcast %cst_33 : f32 to vector<2x32xf32>
      %43 = arith.addf %42, %41 : vector<2x32xf32>
      %44 = arith.divf %42, %43 : vector<2x32xf32>
      %45 = vector.shape_cast %44 : vector<2x32xf32> to vector<2x1x32xf32>
      %c0_34 = arith.constant 0 : index
      %c0_35 = arith.constant 0 : index
      %c0_36 = arith.constant 0 : index
      %46 = vector.load %arg7[%c0_34, %c0_35, %c0_36] : memref<2x1x32xf32, #tpu.memory_space<vmem>>, vector<2x1x32xf32>
      tpu.vector_store %arg7[%c0_34, %c0_35, %c0_36], %45 {strides = array<i32>} : memref<2x1x32xf32, #tpu.memory_space<vmem>>, vector<2x1x32xf32>,
    } else {
    }
    return
  }
  func.func @transform_0(%arg0: i32, %arg1: i32) -> (i32, i32, i32) {
    %c0_i32 = arith.constant 0 : i32
    %c0_i32_0 = arith.constant 0 : i32
    return %arg0, %c0_i32, %arg1 : i32, i32, i32
  }
  func.func @transform_1(%arg0: i32, %arg1: i32) -> (i32, i32) {
    %c0_i32 = arith.constant 0 : i32
    %c0_i32_0 = arith.constant 0 : i32
    %c0_i32_1 = arith.constant 0 : i32
    return %c0_i32, %c0_i32_0 : i32, i32
  }
  func.func @transform_2(%arg0: i32, %arg1: i32) -> (i32, i32) {
    %c0_i32 = arith.constant 0 : i32
    %c0_i32_0 = arith.constant 0 : i32
    %c0_i32_1 = arith.constant 0 : i32
    return %c0_i32, %c0_i32_0 : i32, i32
  }
  func.func @transform_3(%arg0: i32, %arg1: i32) -> (i32, i32) {
    %c0_i32 = arith.constant 0 : i32
    %c0_i32_0 = arith.constant 0 : i32
    %c0_i32_1 = arith.constant 0 : i32
    return %c0_i32, %c0_i32_0 : i32, i32
  }
  func.func @transform_4(%arg0: i32, %arg1: i32) -> (i32, i32) {
    %c0_i32 = arith.constant 0 : i32
    %c0_i32_0 = arith.constant 0 : i32
    %c0_i32_1 = arith.constant 0 : i32
    return %c0_i32, %c0_i32_0 : i32, i32
  }
  func.func @transform_5(%arg0: i32, %arg1: i32) -> (i32, i32, i32) {
    %c0_i32 = arith.constant 0 : i32
    %c0_i32_0 = arith.constant 0 : i32
    %c0_i32_1 = arith.constant 0 : i32
    return %arg0, %c0_i32, %c0_i32_0 : i32, i32, i32
  }
}

</mosaic_0001>

<llo_original>
// kernel: tpu_custom_call.1
$region0: #{tpu_custom_call.1}
  #allocation0 [shape = 'u32[]', space=smem, size = 0x4, offset = 0x4, fixed_abs, tag = 'smem constant byte address 0x4 - core index']
  #allocation1 [shape = 'u32[144,128]{1,0:T(1,128)}', space=vmem, size = 0x12000, scoped, tag = 'internal scratch']
  #allocation2 [shape = 'f32[2,32]{1,0:T(2,128)}', space=vmem, size = 0x400, scoped, tag = 'scratch operand']
  #allocation3 [shape = 'f32[2,32]{1,0:T(2,128)}', space=vmem, size = 0x400, scoped, tag = 'scratch operand']
  %s0 = inlined_call_operand.hbm [shape: f32[2,32,256], index: 0, kind: input, shape index: {}]
  %s1 = inlined_call_operand.vmem [shape: f32[32,2], index: 1, kind: input, shape index: {}]
  %s2 = inlined_call_operand.vmem [shape: f32[1,2], index: 2, kind: input, shape index: {}]
  %s3 = inlined_call_operand.vmem [shape: f32[2,32], index: 3, kind: input, shape index: {}]
  %s4 = inlined_call_operand.vmem [shape: f32[1,32], index: 4, kind: input, shape index: {}]
  %s5 = inlined_call_operand.hbm [shape: f32[2,1,32], index: 5, kind: output, shape index: {}]
  %s6 = sld [smem:[#allocation0]]
  $region42: #{tpu_custom_call.1} parent=0
    _
  %s8 = ssub.s32 1, %s6
  %s9 = scalar_select 0, %s8, %s6
  $region1: #{tpu_custom_call.1} parent=0
    #allocation4 [shape = 'u8[65536]{0}', space=vmem, size = 0x10000, scoped, tag = 'input window, operand 0, single buffered']
    #allocation5 [shape = 's32[1]{0}', space=sflag, size = 0x4, scoped, tag = 'scoped memory for tpu_custom_call.1']
    #allocation6 [shape = 's32[1]{0}', space=sflag, size = 0x4, scoped, tag = 'scoped memory for tpu_custom_call.1']
    #allocation7 [shape = 'u8[1024]{0}', space=vmem, size = 0x400, scoped, tag = 'output window, operand 0, single buffered']
    %10 = vsyncpa [#allocation5], 0
    %11 = vsyncpa [#allocation6], 0
    // Predicated region
    $region2: #{tpu_custom_call.1} parent=1 // pred_check
      _
    $region3: #{tpu_custom_call.1} parent=1 // pred_check_branch
      %13 = sbr.rel (0) target = $region5
    $region4: #{tpu_custom_call.1} parent=1 // pred_region
      %s15 = ssub.s32 2048, 2048
      %16 = vsyncadd [#allocation5], %s15
      %s17 = sshll.u32 [#allocation4], 4
      %s18 = int_to_ptr.vmem [resolvable:$true] %s17
      %23 = dma.hbm_to_vmem [thread:$0]  %s0, 2048, %s18, [#allocation5], 256, 256, 16
    $region5: #{tpu_custom_call.1} parent=1 // pred_fallthru
      _
    // Predicated region
    $region6: #{tpu_custom_call.1} parent=1 // pred_check
      _
    $region7: #{tpu_custom_call.1} parent=1 // pred_check_branch
      %25 = sbr.rel (0) target = $region9
    $region8: #{tpu_custom_call.1} parent=1 // pred_region
      _
    $region9: #{tpu_custom_call.1} parent=1 // pred_fallthru
      _
    // Predicated region
    $region10: #{tpu_custom_call.1} parent=1 // pred_check
      _
    $region11: #{tpu_custom_call.1} parent=1 // pred_check_branch
      %27 = sbr.rel (0) target = $region13
    $region12: #{tpu_custom_call.1} parent=1 // pred_region
      _
    $region13: #{tpu_custom_call.1} parent=1 // pred_fallthru
      _
    // Predicated region
    $region14: #{tpu_custom_call.1} parent=1 // pred_check
      _
    $region15: #{tpu_custom_call.1} parent=1 // pred_check_branch
      %29 = sbr.rel (0) target = $region17
    $region16: #{tpu_custom_call.1} parent=1 // pred_region
      _
    $region17: #{tpu_custom_call.1} parent=1 // pred_fallthru
      _
    // Predicated region
    $region18: #{tpu_custom_call.1} parent=1 // pred_check
      _
    $region19: #{tpu_custom_call.1} parent=1 // pred_check_branch
      %31 = sbr.rel (0) target = $region21
    $region20: #{tpu_custom_call.1} parent=1 // pred_region
      _
    $region21: #{tpu_custom_call.1} parent=1 // pred_fallthru
      _
    // Predicated region
    $region22: #{tpu_custom_call.1} parent=1 // pred_check
      _
    $region23: #{tpu_custom_call.1} parent=1 // pred_check_branch
      %33 = sbr.rel (0) target = $region25
    $region24: #{tpu_custom_call.1} parent=1 // pred_region
      %34 = dma.done [#allocation5], 2048
    $region25: #{tpu_custom_call.1} parent=1 // pred_fallthru
      _
    %p35 = scmp.eq.s32.totalorder 0, 0
    // Predicated region
    $region26: #{tpu_custom_call.1} parent=1 // pred_check
      %p36 = pneg %p35
    $region27: #{tpu_custom_call.1} parent=1 // pred_check_branch
      %38 = sbr.rel (%p36) target = $region29
    $region28: #{tpu_custom_call.1} parent=1 // pred_region
      %vm39 = vcmask 254976
      %40 = vst.msk [vmem:[#allocation2] sm:$0x3] %vm39, 0.0
      %41 = vst.msk [vmem:[#allocation3] sm:$0x3] %vm39, -inf
    $region29: #{tpu_custom_call.1} parent=1 // pred_fallthru
      _
    %v42 = vld [vmem:[#allocation4] sm:$0xff]
    %v43 = vld [vmem:[#allocation4 + $0x8] sm:$0xff]
    %v44 = vld [vmem:[#allocation4 + $0x10] sm:$0xff]
    %v45 = vld [vmem:[#allocation4 + $0x18] sm:$0xff]
    %v46 = vld [vmem:[#allocation4 + $0x20] sm:$0xff]
    %v47 = vld [vmem:[#allocation4 + $0x28] sm:$0xff]
    %v48 = vld [vmem:[#allocation4 + $0x30] sm:$0xff]
    %v49 = vld [vmem:[#allocation4 + $0x38] sm:$0xff]
    %v50 = vld [vmem:[#allocation4 + $0x40] sm:$0xff]
    %v51 = vld [vmem:[#allocation4 + $0x48] sm:$0xff]
    %v52 = vld [vmem:[#allocation4 + $0x50] sm:$0xff]
    %v53 = vld [vmem:[#allocation4 + $0x58] sm:$0xff]
    %v54 = vld [vmem:[#allocation4 + $0x60] sm:$0xff]
    %v55 = vld [vmem:[#allocation4 + $0x68] sm:$0xff]
    %v56 = vld [vmem:[#allocation4 + $0x70] sm:$0xff]
    %v57 = vld [vmem:[#allocation4 + $0x78] sm:$0xff]
    %v58 = vld [vmem:[#allocation2] sm:$0x3]
    %v59 = vadd.f32 %v42, %v43
    %60 = vadd.xlane.f32.xlu0 %v59
    %v61 = vpop.xlane.xlu0 %60
    %v62 = vadd.f32 %v44, %v45
    %63 = vadd.xlane.f32.xlu0 %v62
    %v64 = vpop.xlane.xlu0 %63
    %v65 = vadd.f32 %v46, %v47
    %66 = vadd.xlane.f32.xlu0 %v65
    %v67 = vpop.xlane.xlu0 %66
    %v68 = vadd.f32 %v48, %v49
    %69 = vadd.xlane.f32.xlu0 %v68
    %v70 = vpop.xlane.xlu0 %69
    %v71 = vadd.f32 %v50, %v51
    %72 = vadd.xlane.f32.xlu0 %v71
    %v73 = vpop.xlane.xlu0 %72
    %v74 = vadd.f32 %v52, %v53
    %75 = vadd.xlane.f32.xlu0 %v74
    %v76 = vpop.xlane.xlu0 %75
    %v77 = vadd.f32 %v54, %v55
    %78 = vadd.xlane.f32.xlu0 %v77
    %v79 = vpop.xlane.xlu0 %78
    %v80 = vadd.f32 %v56, %v57
    %81 = vadd.xlane.f32.xlu0 %v80
    %v82 = vpop.xlane.xlu0 %81
    %v91 = vlaneseq
    %v92 = vand.u32 %v91, 127
    %v93 = vlaneseq
    %v94 = vshrl.u32 %v93, 7
    %v95 = vsub.s32 %v92, %v94
    %v96 = vrot.slane %v61, %v95
    %v97 = vadd.s32 %v92, 4294967288
    %v98 = vlaneseq
    %v99 = vshrl.u32 %v98, 7
    %v100 = vsub.s32 %v97, %v99
    %v101 = vrot.slane %v64, %v100
    %vm102 = vcmask 130112
    %v103 = vsel %vm102, %v101, %v96
    %v104 = vadd.s32 %v92, 4294967280
    %v105 = vlaneseq
    %v106 = vshrl.u32 %v105, 7
    %v107 = vsub.s32 %v104, %v106
    %v108 = vrot.slane %v67, %v107
    %vm109 = vcmask 195712
    %v110 = vsel %vm109, %v108, %v103
    %v111 = vadd.s32 %v92, 4294967272
    %v112 = vlaneseq
    %v113 = vshrl.u32 %v112, 7
    %v114 = vsub.s32 %v111, %v113
    %v115 = vrot.slane %v70, %v114
    %vm116 = vcmask 261312
    %v117 = vsel %vm116, %v115, %v110
    %v118 = vlaneseq
    %v119 = vshrl.u32 %v118, 7
    %v120 = vsub.s32 %v92, %v119
    %v121 = vrot.slane %v73, %v120
    %v122 = vlaneseq
    %v123 = vshrl.u32 %v122, 7
    %v124 = vsub.s32 %v97, %v123
    %v125 = vrot.slane %v76, %v124
    %v126 = vsel %vm102, %v125, %v121
    %v127 = vlaneseq
    %v128 = vshrl.u32 %v127, 7
    %v129 = vsub.s32 %v104, %v128
    %v130 = vrot.slane %v79, %v129
    %v131 = vsel %vm109, %v130, %v126
    %v132 = vlaneseq
    %v133 = vshrl.u32 %v132, 7
    %v134 = vsub.s32 %v111, %v133
    %v135 = vrot.slane %v82, %v134
    %v136 = vsel %vm116, %v135, %v131
    %vm137 = vcmask 1041409
    %v138 = vsel %vm137, %v136, %v117
    %v140 = vadd.f32 %v58, %v138
    %vm141 = vcmask 254976
    %142 = vst.msk [vmem:[#allocation2] sm:$0x3] %vm141, %v140
    %v143 = vld [vmem:[#allocation3] sm:$0x3]
    %v144 = vmax.f32 %v42, %v43
    %145 = vmax.xlane.f32.xlu0 %v144
    %v146 = vpop.xlane.xlu0 %145
    %v147 = vmax.f32 %v44, %v45
    %148 = vmax.xlane.f32.xlu0 %v147
    %v149 = vpop.xlane.xlu0 %148
    %v150 = vmax.f32 %v46, %v47
    %151 = vmax.xlane.f32.xlu0 %v150
    %v152 = vpop.xlane.xlu0 %151
    %v153 = vmax.f32 %v48, %v49
    %154 = vmax.xlane.f32.xlu0 %v153
    %v155 = vpop.xlane.xlu0 %154
    %v156 = vmax.f32 %v50, %v51
    %157 = vmax.xlane.f32.xlu0 %v156
    %v158 = vpop.xlane.xlu0 %157
    %v159 = vmax.f32 %v52, %v53
    %160 = vmax.xlane.f32.xlu0 %v159
    %v161 = vpop.xlane.xlu0 %160
    %v162 = vmax.f32 %v54, %v55
    %163 = vmax.xlane.f32.xlu0 %v162
    %v164 = vpop.xlane.xlu0 %163
    %v165 = vmax.f32 %v56, %v57
    %166 = vmax.xlane.f32.xlu0 %v165
    %v167 = vpop.xlane.xlu0 %166
    %v176 = vlaneseq
    %v177 = vshrl.u32 %v176, 7
    %v178 = vsub.s32 %v92, %v177
    %v179 = vrot.slane %v146, %v178
    %v180 = vlaneseq
    %v181 = vshrl.u32 %v180, 7
    %v182 = vsub.s32 %v97, %v181
    %v183 = vrot.slane %v149, %v182
    %v184 = vsel %vm102, %v183, %v179
    %v185 = vlaneseq
    %v186 = vshrl.u32 %v185, 7
    %v187 = vsub.s32 %v104, %v186
    %v188 = vrot.slane %v152, %v187
    %v189 = vsel %vm109, %v188, %v184
    %v190 = vlaneseq
    %v191 = vshrl.u32 %v190, 7
    %v192 = vsub.s32 %v111, %v191
    %v193 = vrot.slane %v155, %v192
    %v194 = vsel %vm116, %v193, %v189
    %v195 = vlaneseq
    %v196 = vshrl.u32 %v195, 7
    %v197 = vsub.s32 %v92, %v196
    %v198 = vrot.slane %v158, %v197
    %v199 = vlaneseq
    %v200 = vshrl.u32 %v199, 7
    %v201 = vsub.s32 %v97, %v200
    %v202 = vrot.slane %v161, %v201
    %v203 = vsel %vm102, %v202, %v198
    %v204 = vlaneseq
    %v205 = vshrl.u32 %v204, 7
    %v206 = vsub.s32 %v104, %v205
    %v207 = vrot.slane %v164, %v206
    %v208 = vsel %vm109, %v207, %v203
    %v209 = vlaneseq
    %v210 = vshrl.u32 %v209, 7
    %v211 = vsub.s32 %v111, %v210
    %v212 = vrot.slane %v167, %v211
    %v213 = vsel %vm116, %v212, %v208
    %v214 = vsel %vm137, %v213, %v194
    %v216 = vmax.f32 %v143, %v214
    %217 = vst.msk [vmem:[#allocation3] sm:$0x3] %vm141, %v216
    // Predicated region
    $region30: #{tpu_custom_call.1} parent=1 // pred_check
      %p218 = pneg %p35
    $region31: #{tpu_custom_call.1} parent=1 // pred_check_branch
      %220 = sbr.rel (%p218) target = $region33
    $region32: #{tpu_custom_call.1} parent=1 // pred_region
      %v221 = vld [vmem:[#allocation2] sm:$0x3]
      %v222 = vmul.f32 %v221, 0.00390625
      %v223 = vld [vmem:[#allocation3] sm:$0x3]
      %v224 = vld [vmem:[%s1] sm:$0xff]
      %v225 = vld [vmem:[%s1 + $0x8] sm:$0xff]
      %v226 = vld [vmem:[%s1 + $0x10] sm:$0xff]
      %v227 = vld [vmem:[%s1 + $0x18] sm:$0xff]
      %v228 = vld [vmem:[%s2] sm:$0x1]
      %v229 = vld [vmem:[%s3] sm:$0x3]
      %v230 = vld [vmem:[%s4] sm:$0x1]
      %v232 = vlaneseq
      %v233 = vshrl.u32 %v232, 7
      %v234 = vsub.s32 0, %v233
      %v235 = vrot.slane %v228, %v234
      %vm237 = vcmask 261120
      %v239 = vsel %vm237, %v222, 0
      %241 = vmatprep.subr.mxu0 0.0
      %242 = vmatpush1.msra.mxu0 0.0
      %243 = vmatprep.subr.mxu0 0.0
      %244 = vmatpush1.msra.mxu0 0.0
      %245 = vmatprep.subr.mxu0 0.0
      %246 = vmatpush1.msra.mxu0 0.0
      %247 = vmatprep.subr.mxu0 0.0
      %248 = vmatpush1.msra.mxu0 0.0
      %249 = vmatprep.subr.mxu0 0.0
      %250 = vmatpush1.msra.mxu0 0.0
      %251 = vmatprep.subr.mxu0 0.0
      %252 = vmatpush1.msra.mxu0 0.0
      %253 = vmatprep.subr.mxu0 0.0
      %254 = vmatpush1.msra.mxu0 0.0
      %255 = vmatprep.subr.mxu0 0.0
      %256 = vmatpush1.msra.mxu0 0.0
      %257 = vmatprep.subr.mxu0 0.0
      %258 = vmatpush1.msra.mxu0 0.0
      %259 = vmatprep.subr.mxu0 0.0
      %260 = vmatpush1.msra.mxu0 0.0
      %261 = vmatprep.subr.mxu0 0.0
      %262 = vmatpush1.msra.mxu0 0.0
      %263 = vmatprep.subr.mxu0 0.0
      %264 = vmatpush1.msra.mxu0 0.0
      %265 = vmatprep.subr.mxu0 0.0
      %266 = vmatpush1.msra.mxu0 %v227
      %267 = vmatprep.subr.mxu0 0.0
      %268 = vmatpush1.msra.mxu0 %v226
      %269 = vmatprep.subr.mxu0 0.0
      %270 = vmatpush1.msra.mxu0 %v225
      %271 = vmatprep.subr.mxu0 0.0
      %272 = vmatpush1.msra.mxu0 %v224
      %273 = vmatprep.subr.mxu0 0.0
      %274 = vmatpush2.msra.mxu0 0.0
      %275 = vmatprep.subr.mxu0 0.0
      %276 = vmatpush2.msra.mxu0 0.0
      %277 = vmatprep.subr.mxu0 0.0
      %278 = vmatpush2.msra.mxu0 0.0
      %279 = vmatprep.subr.mxu0 0.0
      %280 = vmatpush2.msra.mxu0 0.0
      %281 = vmatprep.subr.mxu0 0.0
      %282 = vmatpush2.msra.mxu0 0.0
      %283 = vmatprep.subr.mxu0 0.0
      %284 = vmatpush2.msra.mxu0 0.0
      %285 = vmatprep.subr.mxu0 0.0
      %286 = vmatpush2.msra.mxu0 0.0
      %287 = vmatprep.subr.mxu0 0.0
      %288 = vmatpush2.msra.mxu0 0.0
      %289 = vmatprep.subr.mxu0 0.0
      %290 = vmatpush2.msra.mxu0 0.0
      %291 = vmatprep.subr.mxu0 0.0
      %292 = vmatpush2.msra.mxu0 0.0
      %293 = vmatprep.subr.mxu0 0.0
      %294 = vmatpush2.msra.mxu0 0.0
      %295 = vmatprep.subr.mxu0 0.0
      %296 = vmatpush2.msra.mxu0 0.0
      %297 = vmatprep.subr.mxu0 0.0
      %298 = vmatpush2.msra.mxu0 0.0
      %299 = vmatprep.subr.mxu0 0.0
      %300 = vmatpush2.msra.mxu0 0.0
      %301 = vmatprep.subr.mxu0 0.0
      %302 = vmatpush2.msra.mxu0 0.0
      %303 = vmatprep.subr.mxu0 0.0
      %304 = vmatpush2.msra.mxu0 0.0
      %305 = vmatprep.mubr.f32.mxu0 0.0
      %306 = vmatmul.mubr.f32.gmra.mxu0 %v239
      %v307 = vpop.f32.mrf.mxu0
      %v308 = vadd.f32 %v235, %v307
      %v309 = vpop.f32.mrf.mxu0
      %310 = vdwg.mxu0
      %v311 = vmax.f32 %v308, 0.0
      %v313 = vlaneseq
      %v314 = vshrl.u32 %v313, 7
      %v315 = vsub.s32 0, %v314
      %v316 = vrot.slane %v230, %v315
      %vm318 = vcmask 15360
      %v320 = vsel %vm318, %v311, 0
      %vm322 = vcmask 1041408
      %v324 = vsel %vm322, %v229, 0
      %326 = vmatprep.subr.mxu0 0.0
      %327 = vmatpush1.msra.mxu0 0.0
      %328 = vmatprep.subr.mxu0 0.0
      %329 = vmatpush1.msra.mxu0 0.0
      %330 = vmatprep.subr.mxu0 0.0
      %331 = vmatpush1.msra.mxu0 0.0
      %332 = vmatprep.subr.mxu0 0.0
      %333 = vmatpush1.msra.mxu0 0.0
      %334 = vmatprep.subr.mxu0 0.0
      %335 = vmatpush1.msra.mxu0 0.0
      %336 = vmatprep.subr.mxu0 0.0
      %337 = vmatpush1.msra.mxu0 0.0
      %338 = vmatprep.subr.mxu0 0.0
      %339 = vmatpush1.msra.mxu0 0.0
      %340 = vmatprep.subr.mxu0 0.0
      %341 = vmatpush1.msra.mxu0 0.0
      %342 = vmatprep.subr.mxu0 0.0
      %343 = vmatpush1.msra.mxu0 0.0
      %344 = vmatprep.subr.mxu0 0.0
      %345 = vmatpush1.msra.mxu0 0.0
      %346 = vmatprep.subr.mxu0 0.0
      %347 = vmatpush1.msra.mxu0 0.0
      %348 = vmatprep.subr.mxu0 0.0
      %349 = vmatpush1.msra.mxu0 0.0
      %350 = vmatprep.subr.mxu0 0.0
      %351 = vmatpush1.msra.mxu0 0.0
      %352 = vmatprep.subr.mxu0 0.0
      %353 = vmatpush1.msra.mxu0 0.0
      %354 = vmatprep.subr.mxu0 0.0
      %355 = vmatpush1.msra.mxu0 0.0
      %356 = vmatprep.subr.mxu0 0.0
      %357 = vmatpush1.msra.mxu0 %v324
      %358 = vmatprep.subr.mxu0 0.0
      %359 = vmatpush2.msra.mxu0 0.0
      %360 = vmatprep.subr.mxu0 0.0
      %361 = vmatpush2.msra.mxu0 0.0
      %362 = vmatprep.subr.mxu0 0.0
      %363 = vmatpush2.msra.mxu0 0.0
      %364 = vmatprep.subr.mxu0 0.0
      %365 = vmatpush2.msra.mxu0 0.0
      %366 = vmatprep.subr.mxu0 0.0
      %367 = vmatpush2.msra.mxu0 0.0
      %368 = vmatprep.subr.mxu0 0.0
      %369 = vmatpush2.msra.mxu0 0.0
      %370 = vmatprep.subr.mxu0 0.0
      %371 = vmatpush2.msra.mxu0 0.0
      %372 = vmatprep.subr.mxu0 0.0
      %373 = vmatpush2.msra.mxu0 0.0
      %374 = vmatprep.subr.mxu0 0.0
      %375 = vmatpush2.msra.mxu0 0.0
      %376 = vmatprep.subr.mxu0 0.0
      %377 = vmatpush2.msra.mxu0 0.0
      %378 = vmatprep.subr.mxu0 0.0
      %379 = vmatpush2.msra.mxu0 0.0
      %380 = vmatprep.subr.mxu0 0.0
      %381 = vmatpush2.msra.mxu0 0.0
      %382 = vmatprep.subr.mxu0 0.0
      %383 = vmatpush2.msra.mxu0 0.0
      %384 = vmatprep.subr.mxu0 0.0
      %385 = vmatpush2.msra.mxu0 0.0
      %386 = vmatprep.subr.mxu0 0.0
      %387 = vmatpush2.msra.mxu0 0.0
      %388 = vmatprep.subr.mxu0 0.0
      %389 = vmatpush2.msra.mxu0 0.0
      %390 = vmatprep.mubr.f32.mxu0 0.0
      %391 = vmatmul.mubr.f32.gmra.mxu0 %v320
      %v392 = vpop.f32.mrf.mxu0
      %v393 = vadd.f32 %v316, %v392
      %v394 = vpop.f32.mrf.mxu0
      %395 = vdwg.mxu0
      %v397 = vsel %vm237, %v223, 0
      %399 = vmatprep.subr.mxu0 0.0
      %400 = vmatpush1.msra.mxu0 0.0
      %401 = vmatprep.subr.mxu0 0.0
      %402 = vmatpush1.msra.mxu0 0.0
      %403 = vmatprep.subr.mxu0 0.0
      %404 = vmatpush1.msra.mxu0 0.0
      %405 = vmatprep.subr.mxu0 0.0
      %406 = vmatpush1.msra.mxu0 0.0
      %407 = vmatprep.subr.mxu0 0.0
      %408 = vmatpush1.msra.mxu0 0.0
      %409 = vmatprep.subr.mxu0 0.0
      %410 = vmatpush1.msra.mxu0 0.0
      %411 = vmatprep.subr.mxu0 0.0
      %412 = vmatpush1.msra.mxu0 0.0
      %413 = vmatprep.subr.mxu0 0.0
      %414 = vmatpush1.msra.mxu0 0.0
      %415 = vmatprep.subr.mxu0 0.0
      %416 = vmatpush1.msra.mxu0 0.0
      %417 = vmatprep.subr.mxu0 0.0
      %418 = vmatpush1.msra.mxu0 0.0
      %419 = vmatprep.subr.mxu0 0.0
      %420 = vmatpush1.msra.mxu0 0.0
      %421 = vmatprep.subr.mxu0 0.0
      %422 = vmatpush1.msra.mxu0 0.0
      %423 = vmatprep.subr.mxu0 0.0
      %424 = vmatpush1.msra.mxu0 %v227
      %425 = vmatprep.subr.mxu0 0.0
      %426 = vmatpush1.msra.mxu0 %v226
      %427 = vmatprep.subr.mxu0 0.0
      %428 = vmatpush1.msra.mxu0 %v225
      %429 = vmatprep.subr.mxu0 0.0
      %430 = vmatpush1.msra.mxu0 %v224
      %431 = vmatprep.subr.mxu0 0.0
      %432 = vmatpush2.msra.mxu0 0.0
      %433 = vmatprep.subr.mxu0 0.0
      %434 = vmatpush2.msra.mxu0 0.0
      %435 = vmatprep.subr.mxu0 0.0
      %436 = vmatpush2.msra.mxu0 0.0
      %437 = vmatprep.subr.mxu0 0.0
      %438 = vmatpush2.msra.mxu0 0.0
      %439 = vmatprep.subr.mxu0 0.0
      %440 = vmatpush2.msra.mxu0 0.0
      %441 = vmatprep.subr.mxu0 0.0
      %442 = vmatpush2.msra.mxu0 0.0
      %443 = vmatprep.subr.mxu0 0.0
      %444 = vmatpush2.msra.mxu0 0.0
      %445 = vmatprep.subr.mxu0 0.0
      %446 = vmatpush2.msra.mxu0 0.0
      %447 = vmatprep.subr.mxu0 0.0
      %448 = vmatpush2.msra.mxu0 0.0
      %449 = vmatprep.subr.mxu0 0.0
      %450 = vmatpush2.msra.mxu0 0.0
      %451 = vmatprep.subr.mxu0 0.0
      %452 = vmatpush2.msra.mxu0 0.0
      %453 = vmatprep.subr.mxu0 0.0
      %454 = vmatpush2.msra.mxu0 0.0
      %455 = vmatprep.subr.mxu0 0.0
      %456 = vmatpush2.msra.mxu0 0.0
      %457 = vmatprep.subr.mxu0 0.0
      %458 = vmatpush2.msra.mxu0 0.0
      %459 = vmatprep.subr.mxu0 0.0
      %460 = vmatpush2.msra.mxu0 0.0
      %461 = vmatprep.subr.mxu0 0.0
      %462 = vmatpush2.msra.mxu0 0.0
      %463 = vmatprep.mubr.f32.mxu0 0.0
      %464 = vmatmul.mubr.f32.gmra.mxu0 %v397
      %v465 = vpop.f32.mrf.mxu0
      %v466 = vadd.f32 %v235, %v465
      %v467 = vpop.f32.mrf.mxu0
      %468 = vdwg.mxu0
      %v469 = vmax.f32 %v466, 0.0
      %v471 = vsel %vm318, %v469, 0
      %473 = vmatprep.subr.mxu0 0.0
      %474 = vmatpush1.msra.mxu0 0.0
      %475 = vmatprep.subr.mxu0 0.0
      %476 = vmatpush1.msra.mxu0 0.0
      %477 = vmatprep.subr.mxu0 0.0
      %478 = vmatpush1.msra.mxu0 0.0
      %479 = vmatprep.subr.mxu0 0.0
      %480 = vmatpush1.msra.mxu0 0.0
      %481 = vmatprep.subr.mxu0 0.0
      %482 = vmatpush1.msra.mxu0 0.0
      %483 = vmatprep.subr.mxu0 0.0
      %484 = vmatpush1.msra.mxu0 0.0
      %485 = vmatprep.subr.mxu0 0.0
      %486 = vmatpush1.msra.mxu0 0.0
      %487 = vmatprep.subr.mxu0 0.0
      %488 = vmatpush1.msra.mxu0 0.0
      %489 = vmatprep.subr.mxu0 0.0
      %490 = vmatpush1.msra.mxu0 0.0
      %491 = vmatprep.subr.mxu0 0.0
      %492 = vmatpush1.msra.mxu0 0.0
      %493 = vmatprep.subr.mxu0 0.0
      %494 = vmatpush1.msra.mxu0 0.0
      %495 = vmatprep.subr.mxu0 0.0
      %496 = vmatpush1.msra.mxu0 0.0
      %497 = vmatprep.subr.mxu0 0.0
      %498 = vmatpush1.msra.mxu0 0.0
      %499 = vmatprep.subr.mxu0 0.0
      %500 = vmatpush1.msra.mxu0 0.0
      %501 = vmatprep.subr.mxu0 0.0
      %502 = vmatpush1.msra.mxu0 0.0
      %503 = vmatprep.subr.mxu0 0.0
      %504 = vmatpush1.msra.mxu0 %v324
      %505 = vmatprep.subr.mxu0 0.0
      %506 = vmatpush2.msra.mxu0 0.0
      %507 = vmatprep.subr.mxu0 0.0
      %508 = vmatpush2.msra.mxu0 0.0
      %509 = vmatprep.subr.mxu0 0.0
      %510 = vmatpush2.msra.mxu0 0.0
      %511 = vmatprep.subr.mxu0 0.0
      %512 = vmatpush2.msra.mxu0 0.0
      %513 = vmatprep.subr.mxu0 0.0
      %514 = vmatpush2.msra.mxu0 0.0
      %515 = vmatprep.subr.mxu0 0.0
      %516 = vmatpush2.msra.mxu0 0.0
      %517 = vmatprep.subr.mxu0 0.0
      %518 = vmatpush2.msra.mxu0 0.0
      %519 = vmatprep.subr.mxu0 0.0
      %520 = vmatpush2.msra.mxu0 0.0
      %521 = vmatprep.subr.mxu0 0.0
      %522 = vmatpush2.msra.mxu0 0.0
      %523 = vmatprep.subr.mxu0 0.0
      %524 = vmatpush2.msra.mxu0 0.0
      %525 = vmatprep.subr.mxu0 0.0
      %526 = vmatpush2.msra.mxu0 0.0
      %527 = vmatprep.subr.mxu0 0.0
      %528 = vmatpush2.msra.mxu0 0.0
      %529 = vmatprep.subr.mxu0 0.0
      %530 = vmatpush2.msra.mxu0 0.0
      %531 = vmatprep.subr.mxu0 0.0
      %532 = vmatpush2.msra.mxu0 0.0
      %533 = vmatprep.subr.mxu0 0.0
      %534 = vmatpush2.msra.mxu0 0.0
      %535 = vmatprep.subr.mxu0 0.0
      %536 = vmatpush2.msra.mxu0 0.0
      %537 = vmatprep.mubr.f32.mxu0 0.0
      %538 = vmatmul.mubr.f32.gmra.mxu0 %v471
      %v539 = vpop.f32.mrf.mxu0
      %v540 = vadd.f32 %v316, %v539
      %v541 = vpop.f32.mrf.mxu0
      %542 = vdwg.mxu0
      %v543 = vadd.f32 %v393, %v540
      %v544 = vxor.u32 %v543, 2147483648
      %v545 = vmul.f32 %v544, 1.442695
      %v546 = vpow.pop %v545
      %v547 = vadd.f32 %v546, 1.0
      %v548 = vrcp.pop %v547
      %v549 = vmul.f32 1.0, %v548
      %v552 = vunpack.c.l.s4 1966171168
      %v553 = vunpack.c.0.s8 %v552
      %v554 = vlaneseq
      %v555 = vshrl.u32 %v554, 7
      %v556 = vsub.s32 %v553, %v555
      %v557 = vrot.slane %v549, %v556
      %v558 = vcombine.high %v557, %v557
      %v560 = vunpack.c.l.s4 1966171168
      %v561 = vunpack.c.0.s8 %v560
      %v562 = vlaneseq
      %v563 = vshrl.u32 %v562, 7
      %v564 = vsub.s32 %v561, %v563
      %v565 = vrot.slane %v557, %v564
      %v567 = vunpack.c.l.s4 1966171168
      %v568 = vunpack.c.0.s8 %v567
      %v569 = vlaneseq
      %v570 = vshrl.u32 %v569, 7
      %v571 = vsub.s32 %v568, %v570
      %v572 = vrot.slane %v558, %v571
      %vm575 = vcmask 253952
      %576 = vst.msk [vmem:[#allocation7] sm:$0x1] %vm575, %v565
      %577 = vst.msk [vmem:[#allocation7 + $0x1] sm:$0x1] %vm575, %v572
    $region33: #{tpu_custom_call.1} parent=1 // pred_fallthru
      _
    // Predicated region
    $region34: #{tpu_custom_call.1} parent=1 // pred_check
      _
    $region35: #{tpu_custom_call.1} parent=1 // pred_check_branch
      %579 = sbr.rel (0) target = $region37
    $region36: #{tpu_custom_call.1} parent=1 // pred_region
      %s581 = ssub.s32 32, 32
      %582 = vsyncadd [#allocation6], %s581
      %s583 = sshll.u32 [#allocation7], 4
      %s584 = int_to_ptr.vmem [resolvable:$true] %s583
      %589 = dma.vmem_to_hbm [thread:$0]  %s584, 32, %s5, [#allocation6], 16, 16, 1
    $region37: #{tpu_custom_call.1} parent=1 // pred_fallthru
      _
    // Predicated region
    $region38: #{tpu_custom_call.1} parent=1 // pred_check
      _
    $region39: #{tpu_custom_call.1} parent=1 // pred_check_branch
      %591 = sbr.rel (0) target = $region41
    $region40: #{tpu_custom_call.1} parent=1 // pred_region
      %592 = dma.done [#allocation6], 32
    $region41: #{tpu_custom_call.1} parent=1 // pred_fallthru
      _
    %593 = vsyncpa [#allocation5], 1
    %594 = vsyncpa [#allocation6], 1

</llo_original>
